<compile_context>
chip_gen: v6e
topology: v6e:2x2x1
jax: 0.10.0
libtpu: 0.0.40
codegen_flags: <defaults>
</compile_context>

<pallas_src>
import jax
import jax.numpy as jnp
from jax.experimental import pallas as pl
from jax.experimental.pallas import tpu as pltpu

# ---------------- model dimensions (small, synthetic) ----------------
STATE_DIM = 4
A_DIM = 2
Z_DIM = 3
H_DIM = 32
B = 2
T = 8

SZ = STATE_DIM + Z_DIM          # 7 : per-path first-layer input width
IN_PAD = 16                     # packed input lane width (LL cols [0,7), AD cols [8,15))
AD_COL0 = 8                     # column where the AD (s_0, z) block starts inside X
LANES = 128                     # lane-dense packed output / weight width

# weight-slab row offsets (all tile-aligned: multiples of 8)
W1_OFF, W1_ROWS = 0, IN_PAD              # (16, 128)
W2_OFF, W2_ROWS = 16, LANES              # (128, 128)
WH1_OFF, WH1_ROWS = 144, LANES           # (128, 128)
WH2_OFF, WH2_ROWS = 272, LANES           # (128, 128)
BIAS_OFF, BIAS_ROWS = 400, 8             # rows: b1, b2, bh1, bh2, softplus-mask
SLAB_ROWS = BIAS_OFF + BIAS_ROWS         # 408

# packed-output lane layout
A_MEAN0 = 0                              # [0, 2)   a_mean
A_SIG0 = A_DIM                           # [2, 4)   a_sig
S_MEAN0 = 2 * A_DIM                      # [4, 8)   sT_mean
S_SIG0 = 2 * A_DIM + STATE_DIM           # [8, 12)  sT_sig


def _softplus(x):
    # matches torch.nn.Softplus (beta=1); logaddexp is numerically stable
    return jnp.logaddexp(0.0, x)


# ---------------- fused kernel ----------------
def decoder_fused_kernel(x_ref, w_ref, out_ref):
    """Whole Decoder.forward as 4 matmuls over one block-diagonal weight slab.

    Rows [0, B*T): LowLevelPolicy; rows [B*T, B*T+B): AbstractDynamics;
    remaining rows are sublane padding.  Static ref slices below are zero-cost
    views of the single weight-slab operand.
    """
    x = x_ref[...]                                            # (24, 16)
    w1 = w_ref[W1_OFF:W1_OFF + W1_ROWS, :]                    # (16, 128)
    w2 = w_ref[W2_OFF:W2_OFF + W2_ROWS, :]                    # (128, 128)
    wh1 = w_ref[WH1_OFF:WH1_OFF + WH1_ROWS, :]                # (128, 128)
    wh2 = w_ref[WH2_OFF:WH2_OFF + WH2_ROWS, :]                # (128, 128)
    b1 = w_ref[BIAS_OFF + 0:BIAS_OFF + 1, :]                  # (1, 128)
    b2 = w_ref[BIAS_OFF + 1:BIAS_OFF + 2, :]
    bh1 = w_ref[BIAS_OFF + 2:BIAS_OFF + 3, :]
    bh2 = w_ref[BIAS_OFF + 3:BIAS_OFF + 4, :]
    sp_mask = w_ref[BIAS_OFF + 4:BIAS_OFF + 5, :]             # 1.0 on sigma lanes

    h1 = jnp.maximum(
        jnp.dot(x, w1, preferred_element_type=jnp.float32) + b1, 0.0)
    feats = jnp.maximum(
        jnp.dot(h1, w2, preferred_element_type=jnp.float32) + b2, 0.0)
    h = jnp.maximum(
        jnp.dot(feats, wh1, preferred_element_type=jnp.float32) + bh1, 0.0)
    o = jnp.dot(h, wh2, preferred_element_type=jnp.float32) + bh2
    out_ref[...] = jnp.where(sp_mask > 0.5, _softplus(o), o)


def run_decoder_kernel(x_slab, w_slab, rows_pad):
    """Grid-less pallas_call: exactly two operand DMAs, one unmasked output store."""
    vmem = pl.BlockSpec(memory_space=pltpu.MemorySpace.VMEM)
    return pl.pallas_call(
        decoder_fused_kernel,
        out_shape=jax.ShapeDtypeStruct((rows_pad, LANES), jnp.float32),
        in_specs=[vmem, vmem],
        out_specs=vmem,
    )(x_slab, w_slab)


# ---------------- parameter construction (deterministic) ----------------
def _linear(key, in_dim, out_dim):
    # mimic torch.nn.Linear default init: U(-1/sqrt(in), 1/sqrt(in))
    kw, kb = jax.random.split(key)
    bound = 1.0 / jnp.sqrt(in_dim)
    w = jax.random.uniform(kw, (in_dim, out_dim), jnp.float32, -bound, bound)
    b = jax.random.uniform(kb, (1, out_dim), jnp.float32, -bound, bound)
    return w, b


def make_mlp_heads_params(key, in_dim, h_dim, out_dim):
    keys = jax.random.split(key, 6)
    w1, b1 = _linear(keys[0], in_dim, h_dim)
    w2, b2 = _linear(keys[1], h_dim, h_dim)
    wm1, bm1 = _linear(keys[2], h_dim, h_dim)
    wm2, bm2 = _linear(keys[3], h_dim, out_dim)
    ws1, bs1 = _linear(keys[4], h_dim, h_dim)
    ws2, bs2 = _linear(keys[5], h_dim, out_dim)
    return dict(w1=w1, b1=b1, w2=w2, b2=b2,
                wm1=wm1, bm1=bm1, wm2=wm2, bm2=bm2,
                ws1=ws1, bs1=bs1, ws2=ws2, bs2=bs2)


def make_decoder_params(key):
    k_ll, k_ad = jax.random.split(key)
    return {
        # LowLevelPolicy: in = state_dim + z_dim, out = a_dim
        'll': make_mlp_heads_params(k_ll, SZ, H_DIM, A_DIM),
        # AbstractDynamics: in = state_dim + z_dim, out = state_dim
        'ad': make_mlp_heads_params(k_ad, SZ, H_DIM, STATE_DIM),
    }
    # TODO(synk): Decoder.emb_layer and Decoder.fc are unused in forward(); omitted.


def pack_decoder_slab(raw):
    """One-time repack (outside jit): all LL/AD weights into ONE block-diagonal
    f32 (408, 128) slab.  LL occupies feature lanes [0, 32) and output lanes
    [0, 4); AD occupies feature lanes [32, 64) and output lanes [4, 12).  The
    block-diagonal structure guarantees the two paths never mix."""
    ll, ad = raw['ll'], raw['ad']
    H = H_DIM

    w1 = jnp.zeros((W1_ROWS, LANES), jnp.float32)
    w1 = w1.at[0:SZ, 0:H].set(ll['w1'])
    w1 = w1.at[AD_COL0:AD_COL0 + SZ, H:2 * H].set(ad['w1'])

    w2 = jnp.zeros((W2_ROWS, LANES), jnp.float32)
    w2 = w2.at[0:H, 0:H].set(ll['w2'])
    w2 = w2.at[H:2 * H, H:2 * H].set(ad['w2'])

    wh1 = jnp.zeros((WH1_ROWS, LANES), jnp.float32)
    wh1 = wh1.at[0:H, 0:H].set(ll['wm1'])
    wh1 = wh1.at[0:H, H:2 * H].set(ll['ws1'])
    wh1 = wh1.at[H:2 * H, 2 * H:3 * H].set(ad['wm1'])
    wh1 = wh1.at[H:2 * H, 3 * H:4 * H].set(ad['ws1'])

    wh2 = jnp.zeros((WH2_ROWS, LANES), jnp.float32)
    wh2 = wh2.at[0:H, A_MEAN0:A_MEAN0 + A_DIM].set(ll['wm2'])
    wh2 = wh2.at[H:2 * H, A_SIG0:A_SIG0 + A_DIM].set(ll['ws2'])
    wh2 = wh2.at[2 * H:3 * H, S_MEAN0:S_MEAN0 + STATE_DIM].set(ad['wm2'])
    wh2 = wh2.at[3 * H:4 * H, S_SIG0:S_SIG0 + STATE_DIM].set(ad['ws2'])

    bias = jnp.zeros((BIAS_ROWS, LANES), jnp.float32)
    bias = bias.at[0, 0:H].set(ll['b1'][0]).at[0, H:2 * H].set(ad['b1'][0])
    bias = bias.at[1, 0:H].set(ll['b2'][0]).at[1, H:2 * H].set(ad['b2'][0])
    bias = (bias.at[2, 0:H].set(ll['bm1'][0])
                .at[2, H:2 * H].set(ll['bs1'][0])
                .at[2, 2 * H:3 * H].set(ad['bm1'][0])
                .at[2, 3 * H:4 * H].set(ad['bs1'][0]))
    bias = (bias.at[3, A_MEAN0:A_MEAN0 + A_DIM].set(ll['bm2'][0])
                .at[3, A_SIG0:A_SIG0 + A_DIM].set(ll['bs2'][0])
                .at[3, S_MEAN0:S_MEAN0 + STATE_DIM].set(ad['bm2'][0])
                .at[3, S_SIG0:S_SIG0 + STATE_DIM].set(ad['bs2'][0]))
    # softplus lane mask (1.0 on sigma lanes) as a constant row of the slab
    bias = (bias.at[4, A_SIG0:A_SIG0 + A_DIM].set(1.0)
                .at[4, S_SIG0:S_SIG0 + STATE_DIM].set(1.0))

    return jnp.concatenate([w1, w2, wh1, wh2, bias], axis=0)   # (408, 128)


# ---------------- Decoder.forward ----------------
def decoder_forward(w_slab, states, z):
    """states: (B, T, state_dim); z: (B, 1, z_dim).
    Returns (sT_mean, sT_sig, a_mean, a_sig) with PyTorch shapes.
    `actions` of the original forward is unused for a_dist='normal'."""
    b, t, sdim = states.shape
    zdim = z.shape[-1]
    n_ll = b * t
    n_rows = n_ll + b
    rows_pad = ((n_rows + 7) // 8) * 8

    states2d = states.reshape(n_ll, sdim)
    z2 = z.reshape(b, zdim)
    z_bt = jnp.broadcast_to(z2[:, None, :], (b, t, zdim)).reshape(n_ll, zdim)
    s0 = states[:, 0, :]                       # .detach() is a forward no-op

    # tiny lane-packed input slab: LL rows carry (s_t, z) in cols [0,7),
    # AD rows carry (s_0, z) in cols [8,15); padding rows/cols are zero.
    x = jnp.zeros((rows_pad, IN_PAD), jnp.float32)
    x = x.at[:n_ll, :sdim].set(states2d)
    x = x.at[:n_ll, sdim:sdim + zdim].set(z_bt)
    x = x.at[n_ll:n_rows, AD_COL0:AD_COL0 + sdim].set(s0)
    x = x.at[n_ll:n_rows, AD_COL0 + sdim:AD_COL0 + sdim + zdim].set(z2)

    packed = run_decoder_kernel(x, w_slab, rows_pad)            # (24, 128)

    a_mean = packed[:n_ll, A_MEAN0:A_MEAN0 + A_DIM].reshape(b, t, A_DIM)
    a_sig = packed[:n_ll, A_SIG0:A_SIG0 + A_DIM].reshape(b, t, A_DIM)
    sT_mean = packed[n_ll:n_rows, S_MEAN0:S_MEAN0 + STATE_DIM].reshape(b, 1, STATE_DIM)
    sT_sig = packed[n_ll:n_rows, S_SIG0:S_SIG0 + STATE_DIM].reshape(b, 1, STATE_DIM)
    return sT_mean, sT_sig, a_mean, a_sig


# ---------------- pure-JAX reference for verification ----------------
def _ref_heads(x, p):
    relu = lambda v: jnp.maximum(v, 0.0)
    f = relu(relu(x @ p['w1'] + p['b1']) @ p['w2'] + p['b2'])
    mean = relu(f @ p['wm1'] + p['bm1']) @ p['wm2'] + p['bm2']
    sig = _softplus(relu(f @ p['ws1'] + p['bs1']) @ p['ws2'] + p['bs2'])
    return mean, sig


def decoder_forward_ref(raw_params, states, z):
    b, t, sdim = states.shape
    zdim = z.shape[-1]
    z_tiled = jnp.broadcast_to(z, (b, t, zdim))
    x = jnp.concatenate([states, z_tiled], axis=-1).reshape(b * t, sdim + zdim)
    a_mean, a_sig = _ref_heads(x, raw_params['ll'])
    s0 = states[:, 0:1, :]
    x0 = jnp.concatenate([s0, z], axis=-1).reshape(b, sdim + zdim)
    sT_mean, sT_sig = _ref_heads(x0, raw_params['ad'])
    return (sT_mean.reshape(b, 1, STATE_DIM), sT_sig.reshape(b, 1, STATE_DIM),
            a_mean.reshape(b, t, A_DIM), a_sig.reshape(b, t, A_DIM))


if __name__ == "__main__":
    key = jax.random.PRNGKey(0)
    k_p, k_s, k_z = jax.random.split(key, 3)

    raw_params = make_decoder_params(k_p)
    w_slab = pack_decoder_slab(raw_params)        # one-time repack, outside jit

    states = jax.random.normal(k_s, (B, T, STATE_DIM), jnp.float32)
    z = jax.random.normal(k_z, (B, 1, Z_DIM), jnp.float32)

    outs = jax.jit(decoder_forward)(w_slab, states, z)
    outs = jax.block_until_ready(outs)
    refs = decoder_forward_ref(raw_params, states, z)

    ok = all(
        jnp.allclose(o, r, atol=1e-5, rtol=1e-5) for o, r in zip(outs, refs)
    )
    shapes_ok = (outs[0].shape == (B, 1, STATE_DIM)
                 and outs[1].shape == (B, 1, STATE_DIM)
                 and outs[2].shape == (B, T, A_DIM)
                 and outs[3].shape == (B, T, A_DIM))
    assert ok and shapes_ok, "mismatch vs reference"
    print("KERNEL_OK")
</pallas_src>

<mosaic_0001>
module attributes {stable_mosaic.version = 11 : i64} {
  func.func @decoder_fused_kernel(%arg0: memref<24x16xf32, #tpu.memory_space<vmem>>, %arg1: memref<408x128xf32, #tpu.memory_space<vmem>>, %arg2: memref<24x128xf32, #tpu.memory_space<vmem>>) attributes {dimension_semantics = [], scalar_prefetch = 0 : i64, scratch_operands = 0 : i64, tpu.core_type = #tpu.core_type<tc>} {
    %c0 = arith.constant 0 : index
    %c0_0 = arith.constant 0 : index
    %0 = vector.load %arg0[%c0, %c0_0] : memref<24x16xf32, #tpu.memory_space<vmem>>, vector<24x16xf32>
    %c0_1 = arith.constant 0 : index
    %c0_2 = arith.constant 0 : index
    %1 = vector.load %arg1[%c0_1, %c0_2] : memref<408x128xf32, #tpu.memory_space<vmem>>, vector<16x128xf32>
    %c16 = arith.constant 16 : index
    %c0_3 = arith.constant 0 : index
    %2 = vector.load %arg1[%c16, %c0_3] : memref<408x128xf32, #tpu.memory_space<vmem>>, vector<128x128xf32>
    %c144 = arith.constant 144 : index
    %c0_4 = arith.constant 0 : index
    %3 = vector.load %arg1[%c144, %c0_4] : memref<408x128xf32, #tpu.memory_space<vmem>>, vector<128x128xf32>
    %c272 = arith.constant 272 : index
    %c0_5 = arith.constant 0 : index
    %4 = vector.load %arg1[%c272, %c0_5] : memref<408x128xf32, #tpu.memory_space<vmem>>, vector<128x128xf32>
    %c400 = arith.constant 400 : index
    %c0_6 = arith.constant 0 : index
    %5 = vector.load %arg1[%c400, %c0_6] : memref<408x128xf32, #tpu.memory_space<vmem>>, vector<1x128xf32>
    %c401 = arith.constant 401 : index
    %c0_7 = arith.constant 0 : index
    %6 = vector.load %arg1[%c401, %c0_7] : memref<408x128xf32, #tpu.memory_space<vmem>>, vector<1x128xf32>
    %c402 = arith.constant 402 : index
    %c0_8 = arith.constant 0 : index
    %7 = vector.load %arg1[%c402, %c0_8] : memref<408x128xf32, #tpu.memory_space<vmem>>, vector<1x128xf32>
    %c403 = arith.constant 403 : index
    %c0_9 = arith.constant 0 : index
    %8 = vector.load %arg1[%c403, %c0_9] : memref<408x128xf32, #tpu.memory_space<vmem>>, vector<1x128xf32>
    %c404 = arith.constant 404 : index
    %c0_10 = arith.constant 0 : index
    %9 = vector.load %arg1[%c404, %c0_10] : memref<408x128xf32, #tpu.memory_space<vmem>>, vector<1x128xf32>
    %cst = arith.constant dense<0.000000e+00> : vector<24x128xf32>
    %10 = tpu.matmul %0, %1, %cst {dimension_numbers = #tpu.dot_dimension_numbers<[1], [0], [0], [1], [0, 0, 1, 1], [], []>} : vector<24x16xf32>, vector<16x128xf32>, vector<24x128xf32> -> vector<24x128xf32>
    %11 = vector.broadcast %5 : vector<1x128xf32> to vector<24x128xf32>
    %12 = arith.addf %10, %11 : vector<24x128xf32>
    %cst_11 = arith.constant 0.000000e+00 : f32
    %13 = vector.broadcast %cst_11 : f32 to vector<24x128xf32>
    %14 = arith.maximumf %12, %13 : vector<24x128xf32>
    %cst_12 = arith.constant dense<0.000000e+00> : vector<24x128xf32>
    %15 = tpu.matmul %14, %2, %cst_12 {dimension_numbers = #tpu.dot_dimension_numbers<[1], [0], [0], [1], [0, 0, 1, 1], [], []>} : vector<24x128xf32>, vector<128x128xf32>, vector<24x128xf32> -> vector<24x128xf32>
    %16 = vector.broadcast %6 : vector<1x128xf32> to vector<24x128xf32>
    %17 = arith.addf %15, %16 : vector<24x128xf32>
    %cst_13 = arith.constant 0.000000e+00 : f32
    %18 = vector.broadcast %cst_13 : f32 to vector<24x128xf32>
    %19 = arith.maximumf %17, %18 : vector<24x128xf32>
    %cst_14 = arith.constant dense<0.000000e+00> : vector<24x128xf32>
    %20 = tpu.matmul %19, %3, %cst_14 {dimension_numbers = #tpu.dot_dimension_numbers<[1], [0], [0], [1], [0, 0, 1, 1], [], []>} : vector<24x128xf32>, vector<128x128xf32>, vector<24x128xf32> -> vector<24x128xf32>
    %21 = vector.broadcast %7 : vector<1x128xf32> to vector<24x128xf32>
    %22 = arith.addf %20, %21 : vector<24x128xf32>
    %cst_15 = arith.constant 0.000000e+00 : f32
    %23 = vector.broadcast %cst_15 : f32 to vector<24x128xf32>
    %24 = arith.maximumf %22, %23 : vector<24x128xf32>
    %cst_16 = arith.constant dense<0.000000e+00> : vector<24x128xf32>
    %25 = tpu.matmul %24, %4, %cst_16 {dimension_numbers = #tpu.dot_dimension_numbers<[1], [0], [0], [1], [0, 0, 1, 1], [], []>} : vector<24x128xf32>, vector<128x128xf32>, vector<24x128xf32> -> vector<24x128xf32>
    %26 = vector.broadcast %8 : vector<1x128xf32> to vector<24x128xf32>
    %27 = arith.addf %25, %26 : vector<24x128xf32>
    %cst_17 = arith.constant 5.000000e-01 : f32
    %28 = vector.broadcast %cst_17 : f32 to vector<1x128xf32>
    %29 = arith.cmpf ogt, %9, %28 : vector<1x128xf32>
    %cst_18 = arith.constant 0.000000e+00 : f32
    %30 = vector.broadcast %cst_18 : f32 to vector<24x128xf32>
    %31 = arith.maximumf %30, %27 : vector<24x128xf32>
    %32 = vector.broadcast %cst_18 : f32 to vector<24x128xf32>
    %33 = arith.subf %32, %27 : vector<24x128xf32>
    %34 = arith.cmpf one, %33, %33 : vector<24x128xf32>
    %35 = vector.broadcast %cst_18 : f32 to vector<24x128xf32>
    %36 = arith.addf %35, %27 : vector<24x128xf32>
    %37 = math.absf %33 : vector<24x128xf32>
    %cst_19 = arith.constant 0.000000e+00 : f32
    %38 = vector.broadcast %cst_19 : f32 to vector<24x128xf32>
    %39 = arith.subf %38, %37 : vector<24x128xf32>
    %40 = math.exp %39 : vector<24x128xf32>
    %41 = math.log1p %40 : vector<24x128xf32>
    %42 = arith.addf %31, %41 : vector<24x128xf32>
    %43 = arith.select %34, %36, %42 : vector<24x128xi1>, vector<24x128xf32>
    %44 = vector.shape_cast %29 : vector<1x128xi1> to vector<1x128xi1>
    %45 = vector.broadcast %44 : vector<1x128xi1> to vector<24x128xi1>
    %46 = arith.select %45, %43, %27 : vector<24x128xi1>, vector<24x128xf32>
    %c0_20 = arith.constant 0 : index
    %c0_21 = arith.constant 0 : index
    %47 = vector.load %arg2[%c0_20, %c0_21] : memref<24x128xf32, #tpu.memory_space<vmem>>, vector<24x128xf32>
    tpu.vector_store %arg2[%c0_20, %c0_21], %46 {strides = array<i32>} : memref<24x128xf32, #tpu.memory_space<vmem>>, vector<24x128xf32>,
    return
  }
}

</mosaic_0001>

<llo_original>
// kernel: decoder_forward.1
$region0: #{decoder_forward.1}
  #allocation0 [shape = 'u32[]', space=smem, size = 0x4, offset = 0x4, fixed_abs, tag = 'smem constant byte address 0x4 - core index']
  #allocation1 [shape = 'u32[144,128]{1,0:T(1,128)}', space=vmem, size = 0x12000, scoped, tag = 'internal scratch']
  %s0 = inlined_call_operand.vmem [shape: f32[24,16], index: 0, kind: input, shape index: {}]
  %s1 = inlined_call_operand.hbm [shape: f32[408,128], index: 1, kind: input, shape index: {}]
  %s2 = inlined_call_operand.vmem [shape: f32[24,128], index: 2, kind: output, shape index: {}]
  %s3 = sld [smem:[#allocation0]]
  $region22: #{decoder_forward.1} parent=0
    _
  %s5 = ssub.s32 1, %s3
  %s6 = scalar_select 0, %s5, %s3
  $region1: #{decoder_forward.1} parent=0
    #allocation2 [shape = 'u8[208896]{0}', space=vmem, size = 0x33000, scoped, tag = 'input window, operand 1, single buffered']
    #allocation3 [shape = 's32[1]{0}', space=sflag, size = 0x4, scoped, tag = 'scoped memory for decoder_forward.1']
    %7 = vsyncpa [#allocation3], 0
    // Predicated region
    $region2: #{decoder_forward.1} parent=1 // pred_check
      _
    $region3: #{decoder_forward.1} parent=1 // pred_check_branch
      %9 = sbr.rel (0) target = $region5
    $region4: #{decoder_forward.1} parent=1 // pred_region
      _
    $region5: #{decoder_forward.1} parent=1 // pred_fallthru
      _
    // Predicated region
    $region6: #{decoder_forward.1} parent=1 // pred_check
      _
    $region7: #{decoder_forward.1} parent=1 // pred_check_branch
      %11 = sbr.rel (0) target = $region9
    $region8: #{decoder_forward.1} parent=1 // pred_region
      %s13 = ssub.s32 6528, 6528
      %14 = vsyncadd [#allocation3], %s13
      %s15 = sshll.u32 [#allocation2], 4
      %s16 = int_to_ptr.vmem [resolvable:$true] %s15
      %21 = dma.hbm_to_vmem [thread:$0]  %s1, 6528, %s16, [#allocation3], 128, 128, 8
    $region9: #{decoder_forward.1} parent=1 // pred_fallthru
      _
    // Predicated region
    $region10: #{decoder_forward.1} parent=1 // pred_check
      _
    $region11: #{decoder_forward.1} parent=1 // pred_check_branch
      %23 = sbr.rel (0) target = $region13
    $region12: #{decoder_forward.1} parent=1 // pred_region
      %24 = dma.done [#allocation3], 6528
    $region13: #{decoder_forward.1} parent=1 // pred_fallthru
      _
    %v25 = vld [vmem:[%s0] sm:$0xff]
    %v26 = vld [vmem:[%s0 + $0x8] sm:$0xff]
    %v27 = vld [vmem:[%s0 + $0x10] sm:$0xff]
    %v28 = vld [vmem:[#allocation2] sm:$0xff]
    %v29 = vld [vmem:[#allocation2 + $0x8] sm:$0xff]
    %v30 = vld [vmem:[#allocation2 + $0x10] sm:$0xff]
    %v31 = vld [vmem:[#allocation2 + $0x18] sm:$0xff]
    %v32 = vld [vmem:[#allocation2 + $0x20] sm:$0xff]
    %v33 = vld [vmem:[#allocation2 + $0x28] sm:$0xff]
    %v34 = vld [vmem:[#allocation2 + $0x30] sm:$0xff]
    %v35 = vld [vmem:[#allocation2 + $0x38] sm:$0xff]
    %v36 = vld [vmem:[#allocation2 + $0x40] sm:$0xff]
    %v37 = vld [vmem:[#allocation2 + $0x48] sm:$0xff]
    %v38 = vld [vmem:[#allocation2 + $0x50] sm:$0xff]
    %v39 = vld [vmem:[#allocation2 + $0x58] sm:$0xff]
    %v40 = vld [vmem:[#allocation2 + $0x60] sm:$0xff]
    %v41 = vld [vmem:[#allocation2 + $0x68] sm:$0xff]
    %v42 = vld [vmem:[#allocation2 + $0x70] sm:$0xff]
    %v43 = vld [vmem:[#allocation2 + $0x78] sm:$0xff]
    %v44 = vld [vmem:[#allocation2 + $0x80] sm:$0xff]
    %v45 = vld [vmem:[#allocation2 + $0x88] sm:$0xff]
    %v46 = vld [vmem:[#allocation2 + $0x90] sm:$0xff]
    %v47 = vld [vmem:[#allocation2 + $0x98] sm:$0xff]
    %v48 = vld [vmem:[#allocation2 + $0xa0] sm:$0xff]
    %v49 = vld [vmem:[#allocation2 + $0xa8] sm:$0xff]
    %v50 = vld [vmem:[#allocation2 + $0xb0] sm:$0xff]
    %v51 = vld [vmem:[#allocation2 + $0xb8] sm:$0xff]
    %v52 = vld [vmem:[#allocation2 + $0xc0] sm:$0xff]
    %v53 = vld [vmem:[#allocation2 + $0xc8] sm:$0xff]
    %v54 = vld [vmem:[#allocation2 + $0xd0] sm:$0xff]
    %v55 = vld [vmem:[#allocation2 + $0xd8] sm:$0xff]
    %v56 = vld [vmem:[#allocation2 + $0xe0] sm:$0xff]
    %v57 = vld [vmem:[#allocation2 + $0xe8] sm:$0xff]
    %v58 = vld [vmem:[#allocation2 + $0xf0] sm:$0xff]
    %v59 = vld [vmem:[#allocation2 + $0xf8] sm:$0xff]
    %v60 = vld [vmem:[#allocation2 + $0x100] sm:$0xff]
    %v61 = vld [vmem:[#allocation2 + $0x108] sm:$0xff]
    %v62 = vld [vmem:[#allocation2 + $0x110] sm:$0xff]
    %v63 = vld [vmem:[#allocation2 + $0x118] sm:$0xff]
    %v64 = vld [vmem:[#allocation2 + $0x120] sm:$0xff]
    %v65 = vld [vmem:[#allocation2 + $0x128] sm:$0xff]
    %v66 = vld [vmem:[#allocation2 + $0x130] sm:$0xff]
    %v67 = vld [vmem:[#allocation2 + $0x138] sm:$0xff]
    %v68 = vld [vmem:[#allocation2 + $0x140] sm:$0xff]
    %v69 = vld [vmem:[#allocation2 + $0x148] sm:$0xff]
    %v70 = vld [vmem:[#allocation2 + $0x150] sm:$0xff]
    %v71 = vld [vmem:[#allocation2 + $0x158] sm:$0xff]
    %v72 = vld [vmem:[#allocation2 + $0x160] sm:$0xff]
    %v73 = vld [vmem:[#allocation2 + $0x168] sm:$0xff]
    %v74 = vld [vmem:[#allocation2 + $0x170] sm:$0xff]
    %v75 = vld [vmem:[#allocation2 + $0x178] sm:$0xff]
    %v76 = vld [vmem:[#allocation2 + $0x180] sm:$0xff]
    %v77 = vld [vmem:[#allocation2 + $0x188] sm:$0xff]
    %v78 = vld [vmem:[#allocation2 + $0x190] sm:$0x1]
    %v79 = vld [vmem:[#allocation2 + $0x191] sm:$0x1]
    %v80 = vld [vmem:[#allocation2 + $0x192] sm:$0x1]
    %v81 = vld [vmem:[#allocation2 + $0x193] sm:$0x1]
    %v82 = vld [vmem:[#allocation2 + $0x194] sm:$0x1]
    %v83 = vlaneseq
    %v84 = vshrl.u32 %v83, 7
    %v85 = vsub.s32 0, %v84
    %v86 = vrot.slane %v78, %v85
    %vm87 = vcmask 130048
    %v89 = vsel %vm87, %v25, 0
    %v92 = vsel %vm87, %v26, 0
    %v95 = vsel %vm87, %v27, 0
    %97 = vmatprep.subr.mxu0 0.0
    %98 = vmatpush1.msra.mxu0 0.0
    %99 = vmatprep.subr.mxu0 0.0
    %100 = vmatpush1.msra.mxu0 0.0
    %101 = vmatprep.subr.mxu0 0.0
    %102 = vmatpush1.msra.mxu0 0.0
    %103 = vmatprep.subr.mxu0 0.0
    %104 = vmatpush1.msra.mxu0 0.0
    %105 = vmatprep.subr.mxu0 0.0
    %106 = vmatpush1.msra.mxu0 0.0
    %107 = vmatprep.subr.mxu0 0.0
    %108 = vmatpush1.msra.mxu0 0.0
    %109 = vmatprep.subr.mxu0 0.0
    %110 = vmatpush1.msra.mxu0 0.0
    %111 = vmatprep.subr.mxu0 0.0
    %112 = vmatpush1.msra.mxu0 0.0
    %113 = vmatprep.subr.mxu0 0.0
    %114 = vmatpush1.msra.mxu0 0.0
    %115 = vmatprep.subr.mxu0 0.0
    %116 = vmatpush1.msra.mxu0 0.0
    %117 = vmatprep.subr.mxu0 0.0
    %118 = vmatpush1.msra.mxu0 0.0
    %119 = vmatprep.subr.mxu0 0.0
    %120 = vmatpush1.msra.mxu0 0.0
    %121 = vmatprep.subr.mxu0 0.0
    %122 = vmatpush1.msra.mxu0 0.0
    %123 = vmatprep.subr.mxu0 0.0
    %124 = vmatpush1.msra.mxu0 0.0
    %125 = vmatprep.subr.mxu0 0.0
    %126 = vmatpush1.msra.mxu0 %v29
    %127 = vmatprep.subr.mxu0 0.0
    %128 = vmatpush1.msra.mxu0 %v28
    %129 = vmatprep.subr.mxu0 0.0
    %130 = vmatpush2.msra.mxu0 0.0
    %131 = vmatprep.subr.mxu0 0.0
    %132 = vmatpush2.msra.mxu0 0.0
    %133 = vmatprep.subr.mxu0 0.0
    %134 = vmatpush2.msra.mxu0 0.0
    %135 = vmatprep.subr.mxu0 0.0
    %136 = vmatpush2.msra.mxu0 0.0
    %137 = vmatprep.subr.mxu0 0.0
    %138 = vmatpush2.msra.mxu0 0.0
    %139 = vmatprep.subr.mxu0 0.0
    %140 = vmatpush2.msra.mxu0 0.0
    %141 = vmatprep.subr.mxu0 0.0
    %142 = vmatpush2.msra.mxu0 0.0
    %143 = vmatprep.subr.mxu0 0.0
    %144 = vmatpush2.msra.mxu0 0.0
    %145 = vmatprep.subr.mxu0 0.0
    %146 = vmatpush2.msra.mxu0 0.0
    %147 = vmatprep.subr.mxu0 0.0
    %148 = vmatpush2.msra.mxu0 0.0
    %149 = vmatprep.subr.mxu0 0.0
    %150 = vmatpush2.msra.mxu0 0.0
    %151 = vmatprep.subr.mxu0 0.0
    %152 = vmatpush2.msra.mxu0 0.0
    %153 = vmatprep.subr.mxu0 0.0
    %154 = vmatpush2.msra.mxu0 0.0
    %155 = vmatprep.subr.mxu0 0.0
    %156 = vmatpush2.msra.mxu0 0.0
    %157 = vmatprep.subr.mxu0 0.0
    %158 = vmatpush2.msra.mxu0 0.0
    %159 = vmatprep.subr.mxu0 0.0
    %160 = vmatpush2.msra.mxu0 0.0
    %161 = vmatprep.mubr.f32.mxu0 0.0
    %162 = vmatmul.mubr.f32.gmra.mxu0 %v89
    %v163 = vpop.f32.mrf.mxu0
    %v164 = vadd.f32 %v86, %v163
    %v165 = vpop.f32.mrf.mxu0
    %166 = vmatprep.mubr.f32.mxu0 0.0
    %167 = vmatmul.mubr.f32.gmra.mxu0 %v92
    %v168 = vpop.f32.mrf.mxu0
    %v169 = vadd.f32 %v86, %v168
    %v170 = vpop.f32.mrf.mxu0
    %171 = vmatprep.mubr.f32.mxu0 0.0
    %172 = vmatmul.mubr.f32.gmra.mxu0 %v95
    %v173 = vpop.f32.mrf.mxu0
    %v174 = vadd.f32 %v86, %v173
    %v175 = vpop.f32.mrf.mxu0
    %176 = vdwg.mxu0
    %v177 = vmax.f32 %v164, 0.0
    %v178 = vmax.f32 %v169, 0.0
    %v179 = vmax.f32 %v174, 0.0
    %v180 = vlaneseq
    %v181 = vshrl.u32 %v180, 7
    %v182 = vsub.s32 0, %v181
    %v183 = vrot.slane %v79, %v182
    %184 = vmatprep.subr.mxu0 0.0
    %185 = vmatpush1.msra.mxu0 %v45
    %186 = vmatprep.subr.mxu0 0.0
    %187 = vmatpush1.msra.mxu0 %v44
    %188 = vmatprep.subr.mxu0 0.0
    %189 = vmatpush1.msra.mxu0 %v43
    %190 = vmatprep.subr.mxu0 0.0
    %191 = vmatpush1.msra.mxu0 %v42
    %192 = vmatprep.subr.mxu0 0.0
    %193 = vmatpush1.msra.mxu0 %v41
    %194 = vmatprep.subr.mxu0 0.0
    %195 = vmatpush1.msra.mxu0 %v40
    %196 = vmatprep.subr.mxu0 0.0
    %197 = vmatpush1.msra.mxu0 %v39
    %198 = vmatprep.subr.mxu0 0.0
    %199 = vmatpush1.msra.mxu0 %v38
    %200 = vmatprep.subr.mxu0 0.0
    %201 = vmatpush1.msra.mxu0 %v37
    %202 = vmatprep.subr.mxu0 0.0
    %203 = vmatpush1.msra.mxu0 %v36
    %204 = vmatprep.subr.mxu0 0.0
    %205 = vmatpush1.msra.mxu0 %v35
    %206 = vmatprep.subr.mxu0 0.0
    %207 = vmatpush1.msra.mxu0 %v34
    %208 = vmatprep.subr.mxu0 0.0
    %209 = vmatpush1.msra.mxu0 %v33
    %210 = vmatprep.subr.mxu0 0.0
    %211 = vmatpush1.msra.mxu0 %v32
    %212 = vmatprep.subr.mxu0 0.0
    %213 = vmatpush1.msra.mxu0 %v31
    %214 = vmatprep.subr.mxu0 0.0
    %215 = vmatpush1.msra.mxu0 %v30
    %216 = vmatprep.subr.mxu0 0.0
    %217 = vmatpush2.msra.mxu0 0.0
    %218 = vmatprep.subr.mxu0 0.0
    %219 = vmatpush2.msra.mxu0 0.0
    %220 = vmatprep.subr.mxu0 0.0
    %221 = vmatpush2.msra.mxu0 0.0
    %222 = vmatprep.subr.mxu0 0.0
    %223 = vmatpush2.msra.mxu0 0.0
    %224 = vmatprep.subr.mxu0 0.0
    %225 = vmatpush2.msra.mxu0 0.0
    %226 = vmatprep.subr.mxu0 0.0
    %227 = vmatpush2.msra.mxu0 0.0
    %228 = vmatprep.subr.mxu0 0.0
    %229 = vmatpush2.msra.mxu0 0.0
    %230 = vmatprep.subr.mxu0 0.0
    %231 = vmatpush2.msra.mxu0 0.0
    %232 = vmatprep.subr.mxu0 0.0
    %233 = vmatpush2.msra.mxu0 0.0
    %234 = vmatprep.subr.mxu0 0.0
    %235 = vmatpush2.msra.mxu0 0.0
    %236 = vmatprep.subr.mxu0 0.0
    %237 = vmatpush2.msra.mxu0 0.0
    %238 = vmatprep.subr.mxu0 0.0
    %239 = vmatpush2.msra.mxu0 0.0
    %240 = vmatprep.subr.mxu0 0.0
    %241 = vmatpush2.msra.mxu0 0.0
    %242 = vmatprep.subr.mxu0 0.0
    %243 = vmatpush2.msra.mxu0 0.0
    %244 = vmatprep.subr.mxu0 0.0
    %245 = vmatpush2.msra.mxu0 0.0
    %246 = vmatprep.subr.mxu0 0.0
    %247 = vmatpush2.msra.mxu0 0.0
    %248 = vmatprep.mubr.f32.mxu0 0.0
    %249 = vmatmul.mubr.f32.gmra.mxu0 %v177
    %v250 = vpop.f32.mrf.mxu0
    %v251 = vadd.f32 %v183, %v250
    %v252 = vpop.f32.mrf.mxu0
    %253 = vmatprep.mubr.f32.mxu0 0.0
    %254 = vmatmul.mubr.f32.gmra.mxu0 %v178
    %v255 = vpop.f32.mrf.mxu0
    %v256 = vadd.f32 %v183, %v255
    %v257 = vpop.f32.mrf.mxu0
    %258 = vmatprep.mubr.f32.mxu0 0.0
    %259 = vmatmul.mubr.f32.gmra.mxu0 %v179
    %v260 = vpop.f32.mrf.mxu0
    %v261 = vadd.f32 %v183, %v260
    %v262 = vpop.f32.mrf.mxu0
    %263 = vdwg.mxu0
    %v264 = vmax.f32 %v251, 0.0
    %v265 = vmax.f32 %v256, 0.0
    %v266 = vmax.f32 %v261, 0.0
    %v267 = vlaneseq
    %v268 = vshrl.u32 %v267, 7
    %v269 = vsub.s32 0, %v268
    %v270 = vrot.slane %v80, %v269
    %271 = vmatprep.subr.mxu0 0.0
    %272 = vmatpush1.msra.mxu0 %v61
    %273 = vmatprep.subr.mxu0 0.0
    %274 = vmatpush1.msra.mxu0 %v60
    %275 = vmatprep.subr.mxu0 0.0
    %276 = vmatpush1.msra.mxu0 %v59
    %277 = vmatprep.subr.mxu0 0.0
    %278 = vmatpush1.msra.mxu0 %v58
    %279 = vmatprep.subr.mxu0 0.0
    %280 = vmatpush1.msra.mxu0 %v57
    %281 = vmatprep.subr.mxu0 0.0
    %282 = vmatpush1.msra.mxu0 %v56
    %283 = vmatprep.subr.mxu0 0.0
    %284 = vmatpush1.msra.mxu0 %v55
    %285 = vmatprep.subr.mxu0 0.0
    %286 = vmatpush1.msra.mxu0 %v54
    %287 = vmatprep.subr.mxu0 0.0
    %288 = vmatpush1.msra.mxu0 %v53
    %289 = vmatprep.subr.mxu0 0.0
    %290 = vmatpush1.msra.mxu0 %v52
    %291 = vmatprep.subr.mxu0 0.0
    %292 = vmatpush1.msra.mxu0 %v51
    %293 = vmatprep.subr.mxu0 0.0
    %294 = vmatpush1.msra.mxu0 %v50
    %295 = vmatprep.subr.mxu0 0.0
    %296 = vmatpush1.msra.mxu0 %v49
    %297 = vmatprep.subr.mxu0 0.0
    %298 = vmatpush1.msra.mxu0 %v48
    %299 = vmatprep.subr.mxu0 0.0
    %300 = vmatpush1.msra.mxu0 %v47
    %301 = vmatprep.subr.mxu0 0.0
    %302 = vmatpush1.msra.mxu0 %v46
    %303 = vmatprep.subr.mxu0 0.0
    %304 = vmatpush2.msra.mxu0 0.0
    %305 = vmatprep.subr.mxu0 0.0
    %306 = vmatpush2.msra.mxu0 0.0
    %307 = vmatprep.subr.mxu0 0.0
    %308 = vmatpush2.msra.mxu0 0.0
    %309 = vmatprep.subr.mxu0 0.0
    %310 = vmatpush2.msra.mxu0 0.0
    %311 = vmatprep.subr.mxu0 0.0
    %312 = vmatpush2.msra.mxu0 0.0
    %313 = vmatprep.subr.mxu0 0.0
    %314 = vmatpush2.msra.mxu0 0.0
    %315 = vmatprep.subr.mxu0 0.0
    %316 = vmatpush2.msra.mxu0 0.0
    %317 = vmatprep.subr.mxu0 0.0
    %318 = vmatpush2.msra.mxu0 0.0
    %319 = vmatprep.subr.mxu0 0.0
    %320 = vmatpush2.msra.mxu0 0.0
    %321 = vmatprep.subr.mxu0 0.0
    %322 = vmatpush2.msra.mxu0 0.0
    %323 = vmatprep.subr.mxu0 0.0
    %324 = vmatpush2.msra.mxu0 0.0
    %325 = vmatprep.subr.mxu0 0.0
    %326 = vmatpush2.msra.mxu0 0.0
    %327 = vmatprep.subr.mxu0 0.0
    %328 = vmatpush2.msra.mxu0 0.0
    %329 = vmatprep.subr.mxu0 0.0
    %330 = vmatpush2.msra.mxu0 0.0
    %331 = vmatprep.subr.mxu0 0.0
    %332 = vmatpush2.msra.mxu0 0.0
    %333 = vmatprep.subr.mxu0 0.0
    %334 = vmatpush2.msra.mxu0 0.0
    %335 = vmatprep.mubr.f32.mxu0 0.0
    %336 = vmatmul.mubr.f32.gmra.mxu0 %v264
    %v337 = vpop.f32.mrf.mxu0
    %v338 = vadd.f32 %v270, %v337
    %v339 = vpop.f32.mrf.mxu0
    %340 = vmatprep.mubr.f32.mxu0 0.0
    %341 = vmatmul.mubr.f32.gmra.mxu0 %v265
    %v342 = vpop.f32.mrf.mxu0
    %v343 = vadd.f32 %v270, %v342
    %v344 = vpop.f32.mrf.mxu0
    %345 = vmatprep.mubr.f32.mxu0 0.0
    %346 = vmatmul.mubr.f32.gmra.mxu0 %v266
    %v347 = vpop.f32.mrf.mxu0
    %v348 = vadd.f32 %v270, %v347
    %v349 = vpop.f32.mrf.mxu0
    %350 = vdwg.mxu0
    %v351 = vmax.f32 %v338, 0.0
    %v352 = vmax.f32 %v343, 0.0
    %v353 = vmax.f32 %v348, 0.0
    %v354 = vlaneseq
    %v355 = vshrl.u32 %v354, 7
    %v356 = vsub.s32 0, %v355
    %v357 = vrot.slane %v81, %v356
    %358 = vmatprep.subr.mxu0 0.0
    %359 = vmatpush1.msra.mxu0 %v77
    %360 = vmatprep.subr.mxu0 0.0
    %361 = vmatpush1.msra.mxu0 %v76
    %362 = vmatprep.subr.mxu0 0.0
    %363 = vmatpush1.msra.mxu0 %v75
    %364 = vmatprep.subr.mxu0 0.0
    %365 = vmatpush1.msra.mxu0 %v74
    %366 = vmatprep.subr.mxu0 0.0
    %367 = vmatpush1.msra.mxu0 %v73
    %368 = vmatprep.subr.mxu0 0.0
    %369 = vmatpush1.msra.mxu0 %v72
    %370 = vmatprep.subr.mxu0 0.0
    %371 = vmatpush1.msra.mxu0 %v71
    %372 = vmatprep.subr.mxu0 0.0
    %373 = vmatpush1.msra.mxu0 %v70
    %374 = vmatprep.subr.mxu0 0.0
    %375 = vmatpush1.msra.mxu0 %v69
    %376 = vmatprep.subr.mxu0 0.0
    %377 = vmatpush1.msra.mxu0 %v68
    %378 = vmatprep.subr.mxu0 0.0
    %379 = vmatpush1.msra.mxu0 %v67
    %380 = vmatprep.subr.mxu0 0.0
    %381 = vmatpush1.msra.mxu0 %v66
    %382 = vmatprep.subr.mxu0 0.0
    %383 = vmatpush1.msra.mxu0 %v65
    %384 = vmatprep.subr.mxu0 0.0
    %385 = vmatpush1.msra.mxu0 %v64
    %386 = vmatprep.subr.mxu0 0.0
    %387 = vmatpush1.msra.mxu0 %v63
    %388 = vmatprep.subr.mxu0 0.0
    %389 = vmatpush1.msra.mxu0 %v62
    %390 = vmatprep.subr.mxu0 0.0
    %391 = vmatpush2.msra.mxu0 0.0
    %392 = vmatprep.subr.mxu0 0.0
    %393 = vmatpush2.msra.mxu0 0.0
    %394 = vmatprep.subr.mxu0 0.0
    %395 = vmatpush2.msra.mxu0 0.0
    %396 = vmatprep.subr.mxu0 0.0
    %397 = vmatpush2.msra.mxu0 0.0
    %398 = vmatprep.subr.mxu0 0.0
    %399 = vmatpush2.msra.mxu0 0.0
    %400 = vmatprep.subr.mxu0 0.0
    %401 = vmatpush2.msra.mxu0 0.0
    %402 = vmatprep.subr.mxu0 0.0
    %403 = vmatpush2.msra.mxu0 0.0
    %404 = vmatprep.subr.mxu0 0.0
    %405 = vmatpush2.msra.mxu0 0.0
    %406 = vmatprep.subr.mxu0 0.0
    %407 = vmatpush2.msra.mxu0 0.0
    %408 = vmatprep.subr.mxu0 0.0
    %409 = vmatpush2.msra.mxu0 0.0
    %410 = vmatprep.subr.mxu0 0.0
    %411 = vmatpush2.msra.mxu0 0.0
    %412 = vmatprep.subr.mxu0 0.0
    %413 = vmatpush2.msra.mxu0 0.0
    %414 = vmatprep.subr.mxu0 0.0
    %415 = vmatpush2.msra.mxu0 0.0
    %416 = vmatprep.subr.mxu0 0.0
    %417 = vmatpush2.msra.mxu0 0.0
    %418 = vmatprep.subr.mxu0 0.0
    %419 = vmatpush2.msra.mxu0 0.0
    %420 = vmatprep.subr.mxu0 0.0
    %421 = vmatpush2.msra.mxu0 0.0
    %422 = vmatprep.mubr.f32.mxu0 0.0
    %423 = vmatmul.mubr.f32.gmra.mxu0 %v351
    %v424 = vpop.f32.mrf.mxu0
    %v425 = vadd.f32 %v357, %v424
    %v426 = vpop.f32.mrf.mxu0
    %427 = vmatprep.mubr.f32.mxu0 0.0
    %428 = vmatmul.mubr.f32.gmra.mxu0 %v352
    %v429 = vpop.f32.mrf.mxu0
    %v430 = vadd.f32 %v357, %v429
    %v431 = vpop.f32.mrf.mxu0
    %432 = vmatprep.mubr.f32.mxu0 0.0
    %433 = vmatmul.mubr.f32.gmra.mxu0 %v353
    %v434 = vpop.f32.mrf.mxu0
    %v435 = vadd.f32 %v357, %v434
    %v436 = vpop.f32.mrf.mxu0
    %437 = vdwg.mxu0
    %vm438 = vcmp.gt.f32.partialorder %v82, 0.5
    %v439 = vmax.f32 %v425, 0.0
    %v440 = vmax.f32 %v430, 0.0
    %v441 = vmax.f32 %v435, 0.0
    %v442 = vsub.f32 0.0, %v425
    %v443 = vsub.f32 0.0, %v430
    %v444 = vsub.f32 0.0, %v435
    %vm445 = vcmp.ne.f32.partialorder %v442, %v442
    %vm446 = vcmp.ne.f32.partialorder %v443, %v443
    %vm447 = vcmp.ne.f32.partialorder %v444, %v444
    %v448 = vadd.f32 %v425, 0.0
    %v449 = vadd.f32 %v430, 0.0
    %v450 = vadd.f32 %v435, 0.0
    %v451 = vand.u32 2147483647, %v442
    %v452 = vand.u32 2147483647, %v443
    %v453 = vand.u32 2147483647, %v444
    %v454 = vsub.f32 0.0, %v451
    %v455 = vsub.f32 0.0, %v452
    %v456 = vsub.f32 0.0, %v453
    %v457 = vmul.f32 %v454, 1.442695
    %v458 = vpow.pop %v457
    %v459 = vmul.f32 %v455, 1.442695
    %v460 = vpow.pop %v459
    %v461 = vmul.f32 %v456, 1.442695
    %v462 = vpow.pop %v461
    %v463 = vadd.f32 %v458, 1.0
    %v464 = vlog2.pop %v463
    %v465 = vmul.f32 %v464, 0.6931472
    %v466 = vmul.f32 -0.5, %v458
    %v467 = vadd.f32 %v466, 1.0
    %v468 = vmul.f32 %v467, %v458
    %v469 = vand.u32 2147483647, %v458
    %vm470 = vcmp.lt.f32.partialorder %v469, 0.0004427343
    %v471 = vsel %vm470, %v468, %v465
    %v472 = vadd.f32 %v460, 1.0
    %v473 = vlog2.pop %v472
    %v474 = vmul.f32 %v473, 0.6931472
    %v475 = vmul.f32 -0.5, %v460
    %v476 = vadd.f32 %v475, 1.0
    %v477 = vmul.f32 %v476, %v460
    %v478 = vand.u32 2147483647, %v460
    %vm479 = vcmp.lt.f32.partialorder %v478, 0.0004427343
    %v480 = vsel %vm479, %v477, %v474
    %v481 = vadd.f32 %v462, 1.0
    %v482 = vlog2.pop %v481
    %v483 = vmul.f32 %v482, 0.6931472
    %v484 = vmul.f32 -0.5, %v462
    %v485 = vadd.f32 %v484, 1.0
    %v486 = vmul.f32 %v485, %v462
    %v487 = vand.u32 2147483647, %v462
    %vm488 = vcmp.lt.f32.partialorder %v487, 0.0004427343
    %v489 = vsel %vm488, %v486, %v483
    %v490 = vadd.f32 %v439, %v471
    %v491 = vadd.f32 %v440, %v480
    %v492 = vadd.f32 %v441, %v489
    %v493 = vsel %vm445, %v448, %v490
    %v494 = vsel %vm446, %v449, %v491
    %v495 = vsel %vm447, %v450, %v492
    %v496 = vsel %vm438, 1, 0
    %v497 = vlaneseq
    %v498 = vshrl.u32 %v497, 7
    %v499 = vsub.s32 0, %v498
    %v500 = vrot.slane %v496, %v499
    %vm501 = vcmp.eq.s32.totalorder %v500, 1
    %v502 = vsel %vm501, %v493, %v425
    %v503 = vsel %vm501, %v494, %v430
    %v504 = vsel %vm501, %v495, %v435
    %505 = vst [vmem:[%s2] sm:$0xff] %v502
    %506 = vst [vmem:[%s2 + $0x8] sm:$0xff] %v503
    %507 = vst [vmem:[%s2 + $0x10] sm:$0xff] %v504
    // Predicated region
    $region14: #{decoder_forward.1} parent=1 // pred_check
      _
    $region15: #{decoder_forward.1} parent=1 // pred_check_branch
      %509 = sbr.rel (0) target = $region17
    $region16: #{decoder_forward.1} parent=1 // pred_region
      _
    $region17: #{decoder_forward.1} parent=1 // pred_fallthru
      _
    // Predicated region
    $region18: #{decoder_forward.1} parent=1 // pred_check
      _
    $region19: #{decoder_forward.1} parent=1 // pred_check_branch
      %511 = sbr.rel (0) target = $region21
    $region20: #{decoder_forward.1} parent=1 // pred_region
      _
    $region21: #{decoder_forward.1} parent=1 // pred_fallthru
      _
    %512 = vsyncpa [#allocation3], 1

</llo_original>
